<compile_context>
chip_gen: v5e
topology: v5e:2x2
jax: 0.10.0
libtpu: 0.0.40
codegen_flags: <defaults>
</compile_context>

<pallas_src>
import jax
import jax.numpy as jnp
from jax.experimental import pallas as pl
from jax.experimental.pallas import tpu as pltpu


def _group_lstm_seq_kernel(x_ref, h0_ref, c0_ref, wi_ref, wh_ref,
                           h_seq_ref, c_fin_ref, h_sc, c_sc):
    # x_ref        : (BB, N*I)    current timestep's input block
    # h0_ref/c0_ref: (BB, N*H)    initial state for this batch block
    # wi_ref       : (N*I, 4*N*H) bf16 block-diag, gate-major cols (resident)
    # wh_ref       : (N*H, 4*N*H) bf16 block-diag, gate-major cols (resident)
    # h_seq_ref    : (BB, N*H)    per-step hidden output
    # c_fin_ref    : (BB, N*H)    final cell state (f32), revisited across t
    # h_sc/c_sc    : (BB, N*H)    f32 carried state across the T axis
    t = pl.program_id(1)

    @pl.when(t == 0)
    def _():
        h_sc[...] = h0_ref[...].astype(jnp.float32)
        c_sc[...] = c0_ref[...].astype(jnp.float32)

    xb = x_ref[...].astype(jnp.bfloat16)
    hb = h_sc[...].astype(jnp.bfloat16)
    preact = (jnp.dot(xb, wi_ref[...], preferred_element_type=jnp.float32)
              + jnp.dot(hb, wh_ref[...], preferred_element_type=jnp.float32))

    nh = h_sc.shape[-1]                           # N*H (lane-dense when %128==0)
    gates = jax.nn.sigmoid(preact[:, :3 * nh])    # one EUP slab for i|f|o
    i_t = gates[:, 0 * nh:1 * nh]
    f_t = gates[:, 1 * nh:2 * nh]
    o_t = gates[:, 2 * nh:3 * nh]
    g_t = jnp.tanh(preact[:, 3 * nh:])

    c_t = c_sc[...] * f_t + i_t * g_t             # recurrence stays f32
    h_t = o_t * jnp.tanh(c_t)

    c_sc[...] = c_t
    h_sc[...] = h_t
    h_seq_ref[...] = h_t.astype(h_seq_ref.dtype)
    c_fin_ref[...] = c_t                          # last step's value persists


def prepare_weights(w_i2h, w_h2h, dtype=jnp.bfloat16):
    """Block-diagonal, gate-major fused weights (built once, reused every call).

    w_i2h: (N, I, 4H), w_h2h: (N, H, 4H) ->
      wi_bd: (N*I, 4*N*H), wh_bd: (N*H, 4*N*H), cast to bf16 for the MXU.
    Output column = gate*(N*H) + lstm*H + h, so each gate slice is a contiguous
    lane slab matching the flattened (B, N*H) state layout.
    Footprint grows as O(N^2): keep total weight bytes under ~20 MiB on v7x
    (64 MiB VMEM) / ~40 MiB on v5e/v6e; beyond that switch to an N-chunked grid
    with dense per-LSTM (din, 4H) weights instead of block-diag.
    """
    N, _, fourH = w_i2h.shape
    H = fourH // 4
    eye = jnp.eye(N, dtype=w_i2h.dtype)

    def build(w):
        din = w.shape[1]
        wbd = jnp.einsum("nio,nm->nimo", w, eye)   # (N, din, N, 4H) block-diag
        wbd = wbd.reshape(N * din, N, 4, H)        # rows, lstm, gate, hidden
        wbd = wbd.transpose(0, 2, 1, 3)            # rows, gate, lstm, hidden
        return wbd.reshape(N * din, 4 * N * H).astype(dtype)

    return build(w_i2h), build(w_h2h)


def _group_lstm_pallas(x_seq, h0, c0, wi_bd, wh_bd, *, batch_block=None):
    """x_seq: (T, B, N*I); h0/c0: (B, N*H). Returns (h_seq (T,B,N*H), c_T f32)."""
    T, B, NI = x_seq.shape
    NH = h0.shape[-1]
    BB = B if batch_block is None else batch_block
    if B % BB != 0 or (BB != B and BB % 8 != 0):
        raise ValueError("batch_block must divide B and be a multiple of 8 "
                         "(or equal B).")
    grid = (B // BB, T)

    x_spec = pl.BlockSpec((None, BB, NI), lambda b, t: (t, b, 0))
    state_spec = pl.BlockSpec((BB, NH), lambda b, t: (b, 0))
    wi_spec = pl.BlockSpec(wi_bd.shape, lambda b, t: (0, 0))   # constant -> DMA once
    wh_spec = pl.BlockSpec(wh_bd.shape, lambda b, t: (0, 0))
    hseq_spec = pl.BlockSpec((None, BB, NH), lambda b, t: (t, b, 0))

    flops = 2 * T * B * (NI + NH) * 4 * NH
    bytes_accessed = (x_seq.size * x_seq.dtype.itemsize
                      + wi_bd.size * wi_bd.dtype.itemsize
                      + wh_bd.size * wh_bd.dtype.itemsize
                      + (T + 3) * B * NH * 4)

    h_seq, c_fin = pl.pallas_call(
        _group_lstm_seq_kernel,
        out_shape=(jax.ShapeDtypeStruct((T, B, NH), x_seq.dtype),
                   jax.ShapeDtypeStruct((B, NH), jnp.float32)),
        grid_spec=pltpu.PrefetchScalarGridSpec(
            num_scalar_prefetch=0,
            grid=grid,
            in_specs=[x_spec, state_spec, state_spec, wi_spec, wh_spec],
            out_specs=[hseq_spec, state_spec],
            scratch_shapes=[pltpu.VMEM((BB, NH), jnp.float32),
                            pltpu.VMEM((BB, NH), jnp.float32)]),
        compiler_params=pltpu.CompilerParams(
            dimension_semantics=("parallel", "arbitrary"),
            vmem_limit_bytes=32 * 1024 * 1024),
        cost_estimate=pl.CostEstimate(flops=flops,
                                      transcendentals=4 * T * B * NH,
                                      bytes_accessed=bytes_accessed),
    )(x_seq, h0, c0, wi_bd, wh_bd)
    return h_seq, c_fin


def group_lstm_sequence(x_seq, h0, c0, wi_bd, wh_bd, *, batch_block=None):
    """Time-fused driver. x_seq: (T, B, N, I); h0/c0: (B, N, H).
    Returns (h_seq (T, B, N, H), (h_T, c_T)) with c_T kept in float32."""
    T, B, N, I = x_seq.shape
    H = h0.shape[-1]
    h_seq, c_fin = _group_lstm_pallas(
        x_seq.reshape(T, B, N * I),
        h0.reshape(B, N * H),
        c0.reshape(B, N * H).astype(jnp.float32),
        wi_bd, wh_bd, batch_block=batch_block)
    h_seq = h_seq.reshape(T, B, N, H)
    return h_seq, (h_seq[-1], c_fin.reshape(B, N, H))


def group_lstm_cell(x, hid_state, wi_bd, wh_bd):
    """Single step == GroupLSTMCell.forward(x, (h, c)) -> (h_t, c_t)."""
    h, c = hid_state
    _, (h_t, c_t) = group_lstm_sequence(x[None], h, c, wi_bd, wh_bd)
    return h_t, c_t


# ----------------------------- references -----------------------------------

def _ref_step(x, h, c, w_i2h, w_h2h, *, matmul_dtype=None):
    """Pure-JAX mirror of GroupLSTMCell.forward.  If matmul_dtype is set, the
    matmul operands are rounded to that dtype (mirroring the kernel's bf16 MXU
    path) while all other math stays f32."""
    hp = jax.lax.Precision.HIGHEST
    if matmul_dtype is not None:
        rnd = lambda a: a.astype(matmul_dtype).astype(jnp.float32)
        xm, hm, wi, wh = rnd(x), rnd(h), rnd(w_i2h), rnd(w_h2h)
    else:
        xm, hm, wi, wh = x, h, w_i2h, w_h2h
    preact = (jnp.einsum("bni,nio->bno", xm, wi, precision=hp)
              + jnp.einsum("bnh,nho->bno", hm, wh, precision=hp))
    H = h.shape[-1]
    gates = jax.nn.sigmoid(preact[..., :3 * H])
    g_t = jnp.tanh(preact[..., 3 * H:])
    i_t = gates[..., :H]
    f_t = gates[..., H:2 * H]
    o_t = gates[..., 2 * H:3 * H]
    c_t = c * f_t + i_t * g_t
    h_t = o_t * jnp.tanh(c_t)
    return h_t, c_t


def _ref_sequence(x_seq, h0, c0, w_i2h, w_h2h, *, matmul_dtype=None):
    def step(carry, x_t):
        h, c = carry
        h_t, c_t = _ref_step(x_t, h, c, w_i2h, w_h2h, matmul_dtype=matmul_dtype)
        return (h_t, c_t), h_t
    (h_T, c_T), hs = jax.lax.scan(step, (h0, c0), x_seq)
    return hs, (h_T, c_T)


if __name__ == "__main__":
    batch, num_lstms, inp_size, hidden, seq_len = 2, 4, 16, 32, 8
    key = jax.random.PRNGKey(0)
    k_x, k_h, k_c, k_wi, k_wh = jax.random.split(key, 5)

    # reset_parameters(): uniform(-stdv, stdv), stdv = 1/sqrt(hidden)
    stdv = 1.0 / jnp.sqrt(jnp.float32(hidden))
    w_i2h = jax.random.uniform(k_wi, (num_lstms, inp_size, 4 * hidden),
                               jnp.float32, minval=-stdv, maxval=stdv)
    w_h2h = jax.random.uniform(k_wh, (num_lstms, hidden, 4 * hidden),
                               jnp.float32, minval=-stdv, maxval=stdv)

    x_seq = jax.random.normal(k_x, (seq_len, batch, num_lstms, inp_size),
                              jnp.float32)
    h0 = jax.random.normal(k_h, (batch, num_lstms, hidden), jnp.float32)
    c0 = jax.random.normal(k_c, (batch, num_lstms, hidden), jnp.float32)

    # fused block-diagonal bf16 weights, built once and reused across calls
    wi_bd, wh_bd = prepare_weights(w_i2h, w_h2h)
    wi_bd, wh_bd = jax.block_until_ready((wi_bd, wh_bd))

    # --- single cell step (== GroupLSTMCell.forward) --------------------------
    h1, c1 = jax.jit(group_lstm_cell)(x_seq[0], (h0, c0), wi_bd, wh_bd)
    h1, c1 = jax.block_until_ready((h1, c1))
    assert c1.dtype == jnp.float32, "cell state must stay float32"

    # --- full sequence: time loop fused inside one pallas_call ----------------
    h_all, (h_T, c_T) = jax.jit(group_lstm_sequence)(x_seq, h0, c0, wi_bd, wh_bd)
    h_all, h_T, c_T = jax.block_until_ready((h_all, h_T, c_T))

    # tight check: reference with the same bf16-rounded matmul operands
    h1_bf, c1_bf = _ref_step(x_seq[0], h0, c0, w_i2h, w_h2h,
                             matmul_dtype=jnp.bfloat16)
    hs_bf, (hT_bf, cT_bf) = _ref_sequence(x_seq, h0, c0, w_i2h, w_h2h,
                                          matmul_dtype=jnp.bfloat16)
    assert jnp.allclose(h1, h1_bf, atol=1e-3, rtol=1e-3), "h (step) mismatch"
    assert jnp.allclose(c1, c1_bf, atol=1e-3, rtol=1e-3), "c (step) mismatch"
    assert jnp.allclose(h_all, hs_bf, atol=1e-3, rtol=1e-3), "h (seq) mismatch"
    assert jnp.allclose(c_T, cT_bf, atol=1e-3, rtol=1e-3), "c (seq) mismatch"

    # loose sanity check against pure-f32 module semantics (single step; the
    # only difference is bf16 rounding of the MXU operands)
    h1_f32, c1_f32 = _ref_step(x_seq[0], h0, c0, w_i2h, w_h2h)
    assert jnp.allclose(h1, h1_f32, atol=1e-1, rtol=1e-1), "h (f32) mismatch"
    assert jnp.allclose(c1, c1_f32, atol=1e-1, rtol=1e-1), "c (f32) mismatch"

    print("KERNEL_OK")
</pallas_src>

<mosaic_0001>
module attributes {stable_mosaic.version = 11 : i64} {
  func.func @_group_lstm_seq_kernel(%arg0: i32, %arg1: i32, %arg2: memref<1x2x64xf32, #tpu.memory_space<vmem>>, %arg3: memref<2x128xf32, #tpu.memory_space<vmem>>, %arg4: memref<2x128xf32, #tpu.memory_space<vmem>>, %arg5: memref<64x512xbf16, #tpu.memory_space<vmem>>, %arg6: memref<128x512xbf16, #tpu.memory_space<vmem>>, %arg7: memref<1x2x128xf32, #tpu.memory_space<vmem>>, %arg8: memref<2x128xf32, #tpu.memory_space<vmem>>, %arg9: memref<2x128xf32, #tpu.memory_space<vmem>>, %arg10: memref<2x128xf32, #tpu.memory_space<vmem>>) attributes {dimension_semantics = [#tpu.dimension_semantics<parallel>, #tpu.dimension_semantics<arbitrary>], iteration_bounds = array<i64: 1, 1>, scalar_prefetch = 0 : i64, scratch_operands = 2 : i64, tpu.core_type = #tpu.core_type<tc>, window_params = [{transform_indices = @transform_0, window_bounds = array<i64: 1, 2, 64>}, {transform_indices = @transform_1, window_bounds = array<i64: 2, 128>}, {transform_indices = @transform_2, window_bounds = array<i64: 2, 128>}, {pipeline_mode = #tpu.pipeline_mode<synchronous>, transform_indices = @transform_3, window_bounds = array<i64: 64, 512>}, {pipeline_mode = #tpu.pipeline_mode<synchronous>, transform_indices = @transform_4, window_bounds = array<i64: 128, 512>}, {transform_indices = @transform_5, window_bounds = array<i64: 1, 2, 128>}, {transform_indices = @transform_6, window_bounds = array<i64: 2, 128>}]} {
    %c0_i32 = arith.constant 0 : i32
    %0 = arith.cmpi eq, %arg1, %c0_i32 : i32
    %1 = arith.extui %0 : i1 to i32
    %c0_i32_0 = arith.constant 0 : i32
    %2 = arith.cmpi ne, %1, %c0_i32_0 : i32
    scf.if %2 {
      %c0_22 = arith.constant 0 : index
      %c0_23 = arith.constant 0 : index
      %36 = vector.load %arg3[%c0_22, %c0_23] : memref<2x128xf32, #tpu.memory_space<vmem>>, vector<2x128xf32>
      %c0_24 = arith.constant 0 : index
      %c0_25 = arith.constant 0 : index
      %37 = vector.load %arg9[%c0_24, %c0_25] : memref<2x128xf32, #tpu.memory_space<vmem>>, vector<2x128xf32>
      tpu.vector_store %arg9[%c0_24, %c0_25], %36 {strides = array<i32>} : memref<2x128xf32, #tpu.memory_space<vmem>>, vector<2x128xf32>,
      %c0_26 = arith.constant 0 : index
      %c0_27 = arith.constant 0 : index
      %38 = vector.load %arg4[%c0_26, %c0_27] : memref<2x128xf32, #tpu.memory_space<vmem>>, vector<2x128xf32>
      %c0_28 = arith.constant 0 : index
      %c0_29 = arith.constant 0 : index
      %39 = vector.load %arg10[%c0_28, %c0_29] : memref<2x128xf32, #tpu.memory_space<vmem>>, vector<2x128xf32>
      tpu.vector_store %arg10[%c0_28, %c0_29], %38 {strides = array<i32>} : memref<2x128xf32, #tpu.memory_space<vmem>>, vector<2x128xf32>,
    } else {
    }
    %c0 = arith.constant 0 : index
    %c0_1 = arith.constant 0 : index
    %c0_2 = arith.constant 0 : index
    %3 = vector.load %arg2[%c0, %c0_1, %c0_2] : memref<1x2x64xf32, #tpu.memory_space<vmem>>, vector<1x2x64xf32>
    %4 = vector.shape_cast %3 : vector<1x2x64xf32> to vector<2x64xf32>
    %5 = arith.truncf %4 : vector<2x64xf32> to vector<2x64xbf16>
    %c0_3 = arith.constant 0 : index
    %c0_4 = arith.constant 0 : index
    %6 = vector.load %arg9[%c0_3, %c0_4] : memref<2x128xf32, #tpu.memory_space<vmem>>, vector<2x128xf32>
    %7 = arith.truncf %6 : vector<2x128xf32> to vector<2x128xbf16>
    %c0_5 = arith.constant 0 : index
    %c0_6 = arith.constant 0 : index
    %8 = vector.load %arg5[%c0_5, %c0_6] : memref<64x512xbf16, #tpu.memory_space<vmem>>, vector<64x512xbf16>
    %cst = arith.constant dense<0.000000e+00> : vector<2x512xf32>
    %9 = tpu.matmul %5, %8, %cst {dimension_numbers = #tpu.dot_dimension_numbers<[1], [0], [0], [1], [0, 0, 1, 1], [], []>} : vector<2x64xbf16>, vector<64x512xbf16>, vector<2x512xf32> -> vector<2x512xf32>
    %c0_7 = arith.constant 0 : index
    %c0_8 = arith.constant 0 : index
    %10 = vector.load %arg6[%c0_7, %c0_8] : memref<128x512xbf16, #tpu.memory_space<vmem>>, vector<128x512xbf16>
    %cst_9 = arith.constant dense<0.000000e+00> : vector<2x512xf32>
    %11 = tpu.matmul %7, %10, %cst_9 {dimension_numbers = #tpu.dot_dimension_numbers<[1], [0], [0], [1], [0, 0, 1, 1], [], []>} : vector<2x128xbf16>, vector<128x512xbf16>, vector<2x512xf32> -> vector<2x512xf32>
    %12 = arith.addf %9, %11 : vector<2x512xf32>
    %13 = vector.extract_strided_slice %12 {offsets = [0, 0], sizes = [2, 384], strides = [1, 1]} : vector<2x512xf32> to vector<2x384xf32>
    %14 = arith.negf %13 : vector<2x384xf32>
    %15 = math.exp %14 : vector<2x384xf32>
    %cst_10 = arith.constant 1.000000e+00 : f32
    %16 = vector.broadcast %cst_10 : f32 to vector<2x384xf32>
    %17 = arith.addf %16, %15 : vector<2x384xf32>
    %18 = arith.divf %16, %17 : vector<2x384xf32>
    %19 = vector.extract_strided_slice %18 {offsets = [0, 0], sizes = [2, 128], strides = [1, 1]} : vector<2x384xf32> to vector<2x128xf32>
    %20 = vector.extract_strided_slice %18 {offsets = [0, 128], sizes = [2, 128], strides = [1, 1]} : vector<2x384xf32> to vector<2x128xf32>
    %21 = vector.extract_strided_slice %18 {offsets = [0, 256], sizes = [2, 128], strides = [1, 1]} : vector<2x384xf32> to vector<2x128xf32>
    %22 = vector.extract_strided_slice %12 {offsets = [0, 384], sizes = [2, 128], strides = [1, 1]} : vector<2x512xf32> to vector<2x128xf32>
    %23 = math.tanh %22 : vector<2x128xf32>
    %c0_11 = arith.constant 0 : index
    %c0_12 = arith.constant 0 : index
    %24 = vector.load %arg10[%c0_11, %c0_12] : memref<2x128xf32, #tpu.memory_space<vmem>>, vector<2x128xf32>
    %25 = arith.mulf %24, %20 : vector<2x128xf32>
    %26 = arith.mulf %19, %23 : vector<2x128xf32>
    %27 = arith.addf %25, %26 : vector<2x128xf32>
    %28 = math.tanh %27 : vector<2x128xf32>
    %29 = arith.mulf %21, %28 : vector<2x128xf32>
    %c0_13 = arith.constant 0 : index
    %c0_14 = arith.constant 0 : index
    %30 = vector.load %arg10[%c0_13, %c0_14] : memref<2x128xf32, #tpu.memory_space<vmem>>, vector<2x128xf32>
    tpu.vector_store %arg10[%c0_13, %c0_14], %27 {strides = array<i32>} : memref<2x128xf32, #tpu.memory_space<vmem>>, vector<2x128xf32>,
    %c0_15 = arith.constant 0 : index
    %c0_16 = arith.constant 0 : index
    %31 = vector.load %arg9[%c0_15, %c0_16] : memref<2x128xf32, #tpu.memory_space<vmem>>, vector<2x128xf32>
    tpu.vector_store %arg9[%c0_15, %c0_16], %29 {strides = array<i32>} : memref<2x128xf32, #tpu.memory_space<vmem>>, vector<2x128xf32>,
    %c0_17 = arith.constant 0 : index
    %c0_18 = arith.constant 0 : index
    %c0_19 = arith.constant 0 : index
    %32 = vector.load %arg7[%c0_17, %c0_18, %c0_19] : memref<1x2x128xf32, #tpu.memory_space<vmem>>, vector<1x2x128xf32>
    %33 = vector.shape_cast %32 : vector<1x2x128xf32> to vector<2x128xf32>
    %34 = vector.shape_cast %29 : vector<2x128xf32> to vector<1x2x128xf32>
    tpu.vector_store %arg7[%c0_17, %c0_18, %c0_19], %34 {strides = array<i32>} : memref<1x2x128xf32, #tpu.memory_space<vmem>>, vector<1x2x128xf32>,
    %c0_20 = arith.constant 0 : index
    %c0_21 = arith.constant 0 : index
    %35 = vector.load %arg8[%c0_20, %c0_21] : memref<2x128xf32, #tpu.memory_space<vmem>>, vector<2x128xf32>
    tpu.vector_store %arg8[%c0_20, %c0_21], %27 {strides = array<i32>} : memref<2x128xf32, #tpu.memory_space<vmem>>, vector<2x128xf32>,
    return
  }
  func.func @transform_0(%arg0: i32, %arg1: i32) -> (i32, i32, i32) {
    %c0_i32 = arith.constant 0 : i32
    %c0_i32_0 = arith.constant 0 : i32
    return %arg1, %arg0, %c0_i32 : i32, i32, i32
  }
  func.func @transform_1(%arg0: i32, %arg1: i32) -> (i32, i32) {
    %c0_i32 = arith.constant 0 : i32
    %c0_i32_0 = arith.constant 0 : i32
    return %arg0, %c0_i32 : i32, i32
  }
  func.func @transform_2(%arg0: i32, %arg1: i32) -> (i32, i32) {
    %c0_i32 = arith.constant 0 : i32
    %c0_i32_0 = arith.constant 0 : i32
    return %arg0, %c0_i32 : i32, i32
  }
  func.func @transform_3(%arg0: i32, %arg1: i32) -> (i32, i32) {
    %c0_i32 = arith.constant 0 : i32
    %c0_i32_0 = arith.constant 0 : i32
    %c0_i32_1 = arith.constant 0 : i32
    return %c0_i32, %c0_i32_0 : i32, i32
  }
  func.func @transform_4(%arg0: i32, %arg1: i32) -> (i32, i32) {
    %c0_i32 = arith.constant 0 : i32
    %c0_i32_0 = arith.constant 0 : i32
    %c0_i32_1 = arith.constant 0 : i32
    return %c0_i32, %c0_i32_0 : i32, i32
  }
  func.func @transform_5(%arg0: i32, %arg1: i32) -> (i32, i32, i32) {
    %c0_i32 = arith.constant 0 : i32
    %c0_i32_0 = arith.constant 0 : i32
    return %arg1, %arg0, %c0_i32 : i32, i32, i32
  }
  func.func @transform_6(%arg0: i32, %arg1: i32) -> (i32, i32) {
    %c0_i32 = arith.constant 0 : i32
    %c0_i32_0 = arith.constant 0 : i32
    return %arg0, %c0_i32 : i32, i32
  }
}

</mosaic_0001>

<llo_original>
// kernel: group_lstm_cell.1
$region0: #{group_lstm_cell.1}
  #allocation0 [shape = 'u32[]', space=smem, size = 0x4, offset = 0x4, fixed_abs, tag = 'smem constant byte address 0x4 - core index']
  #allocation1 [shape = 'u32[72,128]{1,0:T(1,128)}', space=vmem, size = 0x9000, scoped, tag = 'internal scratch']
  #allocation2 [shape = 'f32[2,128]{1,0:T(2,128)}', space=vmem, size = 0x400, scoped, tag = 'scratch operand']
  #allocation3 [shape = 'f32[2,128]{1,0:T(2,128)}', space=vmem, size = 0x400, scoped, tag = 'scratch operand']
  %s0 = inlined_call_operand.vmem [shape: f32[1,2,64], index: 0, kind: input, shape index: {}]
  %s1 = inlined_call_operand.vmem [shape: f32[2,128], index: 1, kind: input, shape index: {}]
  %s2 = inlined_call_operand.vmem [shape: f32[2,128], index: 2, kind: input, shape index: {}]
  %s3 = inlined_call_operand.hbm [shape: bf16[64,512], index: 3, kind: input, shape index: {}]
  %s4 = inlined_call_operand.hbm [shape: bf16[128,512], index: 4, kind: input, shape index: {}]
  %s5 = inlined_call_operand.vmem [shape: f32[1,2,128], index: 5, kind: output, shape index: {0}]
  %s6 = inlined_call_operand.vmem [shape: f32[2,128], index: 6, kind: output, shape index: {1}]
  %7 = xla_tuple %s5, %s6
  %s8 = sld [smem:[#allocation0]]
  $region50: #{group_lstm_cell.1} parent=0
    _
  %s10 = ssub.s32 1, %s8
  %s11 = scalar_select 0, %s10, %s8
  $region1: #{group_lstm_cell.1} parent=0
    #allocation4 [shape = 'u8[65536]{0}', space=vmem, size = 0x10000, scoped, tag = 'input window, operand 3, single buffered']
    #allocation5 [shape = 's32[1]{0}', space=sflag, size = 0x4, scoped, tag = 'scoped memory for group_lstm_cell.1']
    #allocation6 [shape = 'u8[131072]{0}', space=vmem, size = 0x20000, scoped, tag = 'input window, operand 4, single buffered']
    #allocation7 [shape = 's32[1]{0}', space=sflag, size = 0x4, scoped, tag = 'scoped memory for group_lstm_cell.1']
    %12 = vsyncpa [#allocation5], 0
    %13 = vsyncpa [#allocation7], 0
    // Predicated region
    $region2: #{group_lstm_cell.1} parent=1 // pred_check
      _
    $region3: #{group_lstm_cell.1} parent=1 // pred_check_branch
      %15 = sbr.rel (0) target = $region5
    $region4: #{group_lstm_cell.1} parent=1 // pred_region
      _
    $region5: #{group_lstm_cell.1} parent=1 // pred_fallthru
      _
    // Predicated region
    $region6: #{group_lstm_cell.1} parent=1 // pred_check
      _
    $region7: #{group_lstm_cell.1} parent=1 // pred_check_branch
      %17 = sbr.rel (0) target = $region9
    $region8: #{group_lstm_cell.1} parent=1 // pred_region
      _
    $region9: #{group_lstm_cell.1} parent=1 // pred_fallthru
      _
    // Predicated region
    $region10: #{group_lstm_cell.1} parent=1 // pred_check
      _
    $region11: #{group_lstm_cell.1} parent=1 // pred_check_branch
      %19 = sbr.rel (0) target = $region13
    $region12: #{group_lstm_cell.1} parent=1 // pred_region
      _
    $region13: #{group_lstm_cell.1} parent=1 // pred_fallthru
      _
    // Predicated region
    $region14: #{group_lstm_cell.1} parent=1 // pred_check
      _
    $region15: #{group_lstm_cell.1} parent=1 // pred_check_branch
      %21 = sbr.rel (0) target = $region17
    $region16: #{group_lstm_cell.1} parent=1 // pred_region
      %23 = vsyncadd [#allocation5], 0
      %s24 = sshll.u32 %s3, 4
      %s25 = int_to_ptr.hbm [resolvable:$true] %s24
      %s26 = sshll.u32 [#allocation4], 4
      %s27 = int_to_ptr.vmem [resolvable:$true] %s26
      %32 = dma.hbm_to_vmem [thread:$0]  %s25, 2048, %s27, [#allocation5], 256, 256, 16
    $region17: #{group_lstm_cell.1} parent=1 // pred_fallthru
      _
    // Predicated region
    $region18: #{group_lstm_cell.1} parent=1 // pred_check
      _
    $region19: #{group_lstm_cell.1} parent=1 // pred_check_branch
      %34 = sbr.rel (0) target = $region21
    $region20: #{group_lstm_cell.1} parent=1 // pred_region
      %36 = vsyncadd [#allocation7], 0
      %s37 = sshll.u32 %s4, 4
      %s38 = int_to_ptr.hbm [resolvable:$true] %s37
      %s39 = sshll.u32 [#allocation6], 4
      %s40 = int_to_ptr.vmem [resolvable:$true] %s39
      %45 = dma.hbm_to_vmem [thread:$0]  %s38, 4096, %s40, [#allocation7], 256, 256, 16
    $region21: #{group_lstm_cell.1} parent=1 // pred_fallthru
      _
    // Predicated region
    $region22: #{group_lstm_cell.1} parent=1 // pred_check
      _
    $region23: #{group_lstm_cell.1} parent=1 // pred_check_branch
      %47 = sbr.rel (0) target = $region25
    $region24: #{group_lstm_cell.1} parent=1 // pred_region
      %49 = dma.done [#allocation5], 2048
    $region25: #{group_lstm_cell.1} parent=1 // pred_fallthru
      _
    // Predicated region
    $region26: #{group_lstm_cell.1} parent=1 // pred_check
      _
    $region27: #{group_lstm_cell.1} parent=1 // pred_check_branch
      %51 = sbr.rel (0) target = $region29
    $region28: #{group_lstm_cell.1} parent=1 // pred_region
      %53 = dma.done [#allocation7], 4096
    $region29: #{group_lstm_cell.1} parent=1 // pred_fallthru
      _
    %p55 = scmp.eq.s32.totalorder 0, 0
    // Predicated region
    $region30: #{group_lstm_cell.1} parent=1 // pred_check
      %p56 = pneg %p55
    $region31: #{group_lstm_cell.1} parent=1 // pred_check_branch
      %58 = sbr.rel (%p56) target = $region33
    $region32: #{group_lstm_cell.1} parent=1 // pred_region
      %v59 = vld [vmem:[%s1] sm:$0x3]
      %60 = vst [vmem:[#allocation2] sm:$0x3] %v59
      %v61 = vld [vmem:[%s2] sm:$0x3]
      %62 = vst [vmem:[#allocation3] sm:$0x3] %v61
    $region33: #{group_lstm_cell.1} parent=1 // pred_fallthru
      _
    %v63 = vld [vmem:[%s0] sm:$0x3]
    %v64 = vpack.c.bf16 %v63, %v63
    %v65 = vld [vmem:[#allocation2] sm:$0x3]
    %v66 = vpack.c.bf16 %v65, %v65
    %v67 = vld [vmem:[#allocation4] sm:$0xff]
    %v68 = vld [vmem:[#allocation4 + $0x8] sm:$0xff]
    %v69 = vld [vmem:[#allocation4 + $0x10] sm:$0xff]
    %v70 = vld [vmem:[#allocation4 + $0x18] sm:$0xff]
    %v71 = vld [vmem:[#allocation4 + $0x20] sm:$0xff]
    %v72 = vld [vmem:[#allocation4 + $0x28] sm:$0xff]
    %v73 = vld [vmem:[#allocation4 + $0x30] sm:$0xff]
    %v74 = vld [vmem:[#allocation4 + $0x38] sm:$0xff]
    %v75 = vld [vmem:[#allocation4 + $0x40] sm:$0xff]
    %v76 = vld [vmem:[#allocation4 + $0x48] sm:$0xff]
    %v77 = vld [vmem:[#allocation4 + $0x50] sm:$0xff]
    %v78 = vld [vmem:[#allocation4 + $0x58] sm:$0xff]
    %v79 = vld [vmem:[#allocation4 + $0x60] sm:$0xff]
    %v80 = vld [vmem:[#allocation4 + $0x68] sm:$0xff]
    %v81 = vld [vmem:[#allocation4 + $0x70] sm:$0xff]
    %v82 = vld [vmem:[#allocation4 + $0x78] sm:$0xff]
    %v83 = vld [vmem:[#allocation6] sm:$0xff]
    %v84 = vld [vmem:[#allocation6 + $0x8] sm:$0xff]
    %v85 = vld [vmem:[#allocation6 + $0x10] sm:$0xff]
    %v86 = vld [vmem:[#allocation6 + $0x18] sm:$0xff]
    %v87 = vld [vmem:[#allocation6 + $0x20] sm:$0xff]
    %v88 = vld [vmem:[#allocation6 + $0x28] sm:$0xff]
    %v89 = vld [vmem:[#allocation6 + $0x30] sm:$0xff]
    %v90 = vld [vmem:[#allocation6 + $0x38] sm:$0xff]
    %v91 = vld [vmem:[#allocation6 + $0x40] sm:$0xff]
    %v92 = vld [vmem:[#allocation6 + $0x48] sm:$0xff]
    %v93 = vld [vmem:[#allocation6 + $0x50] sm:$0xff]
    %v94 = vld [vmem:[#allocation6 + $0x58] sm:$0xff]
    %v95 = vld [vmem:[#allocation6 + $0x60] sm:$0xff]
    %v96 = vld [vmem:[#allocation6 + $0x68] sm:$0xff]
    %v97 = vld [vmem:[#allocation6 + $0x70] sm:$0xff]
    %v98 = vld [vmem:[#allocation6 + $0x78] sm:$0xff]
    %v99 = vld [vmem:[#allocation6 + $0x80] sm:$0xff]
    %v100 = vld [vmem:[#allocation6 + $0x88] sm:$0xff]
    %v101 = vld [vmem:[#allocation6 + $0x90] sm:$0xff]
    %v102 = vld [vmem:[#allocation6 + $0x98] sm:$0xff]
    %v103 = vld [vmem:[#allocation6 + $0xa0] sm:$0xff]
    %v104 = vld [vmem:[#allocation6 + $0xa8] sm:$0xff]
    %v105 = vld [vmem:[#allocation6 + $0xb0] sm:$0xff]
    %v106 = vld [vmem:[#allocation6 + $0xb8] sm:$0xff]
    %v107 = vld [vmem:[#allocation6 + $0xc0] sm:$0xff]
    %v108 = vld [vmem:[#allocation6 + $0xc8] sm:$0xff]
    %v109 = vld [vmem:[#allocation6 + $0xd0] sm:$0xff]
    %v110 = vld [vmem:[#allocation6 + $0xd8] sm:$0xff]
    %v111 = vld [vmem:[#allocation6 + $0xe0] sm:$0xff]
    %v112 = vld [vmem:[#allocation6 + $0xe8] sm:$0xff]
    %v113 = vld [vmem:[#allocation6 + $0xf0] sm:$0xff]
    %v114 = vld [vmem:[#allocation6 + $0xf8] sm:$0xff]
    %v147 = vunpack.c.l.b16 %v83
    %v148 = vunpack.c.h.b16 %v83
    %v149 = vunpack.c.l.b16 %v84
    %v150 = vunpack.c.h.b16 %v84
    %v151 = vunpack.c.l.b16 %v85
    %v152 = vunpack.c.h.b16 %v85
    %v153 = vunpack.c.l.b16 %v86
    %v154 = vunpack.c.h.b16 %v86
    %v155 = vunpack.c.l.b16 %v87
    %v156 = vunpack.c.h.b16 %v87
    %v157 = vunpack.c.l.b16 %v88
    %v158 = vunpack.c.h.b16 %v88
    %v159 = vunpack.c.l.b16 %v89
    %v160 = vunpack.c.h.b16 %v89
    %v161 = vunpack.c.l.b16 %v90
    %v162 = vunpack.c.h.b16 %v90
    %v163 = vunpack.c.l.b16 %v91
    %v164 = vunpack.c.h.b16 %v91
    %v165 = vunpack.c.l.b16 %v92
    %v166 = vunpack.c.h.b16 %v92
    %v167 = vunpack.c.l.b16 %v93
    %v168 = vunpack.c.h.b16 %v93
    %v169 = vunpack.c.l.b16 %v94
    %v170 = vunpack.c.h.b16 %v94
    %v171 = vunpack.c.l.b16 %v95
    %v172 = vunpack.c.h.b16 %v95
    %v173 = vunpack.c.l.b16 %v96
    %v174 = vunpack.c.h.b16 %v96
    %v175 = vunpack.c.l.b16 %v97
    %v176 = vunpack.c.h.b16 %v97
    %v177 = vunpack.c.l.b16 %v98
    %v178 = vunpack.c.h.b16 %v98
    %v179 = vunpack.c.l.b16 %v99
    %v180 = vunpack.c.h.b16 %v99
    %v181 = vunpack.c.l.b16 %v100
    %v182 = vunpack.c.h.b16 %v100
    %v183 = vunpack.c.l.b16 %v101
    %v184 = vunpack.c.h.b16 %v101
    %v185 = vunpack.c.l.b16 %v102
    %v186 = vunpack.c.h.b16 %v102
    %v187 = vunpack.c.l.b16 %v103
    %v188 = vunpack.c.h.b16 %v103
    %v189 = vunpack.c.l.b16 %v104
    %v190 = vunpack.c.h.b16 %v104
    %v191 = vunpack.c.l.b16 %v105
    %v192 = vunpack.c.h.b16 %v105
    %v193 = vunpack.c.l.b16 %v106
    %v194 = vunpack.c.h.b16 %v106
    %v195 = vunpack.c.l.b16 %v107
    %v196 = vunpack.c.h.b16 %v107
    %v197 = vunpack.c.l.b16 %v108
    %v198 = vunpack.c.h.b16 %v108
    %v199 = vunpack.c.l.b16 %v109
    %v200 = vunpack.c.h.b16 %v109
    %v201 = vunpack.c.l.b16 %v110
    %v202 = vunpack.c.h.b16 %v110
    %v203 = vunpack.c.l.b16 %v111
    %v204 = vunpack.c.h.b16 %v111
    %v205 = vunpack.c.l.b16 %v112
    %v206 = vunpack.c.h.b16 %v112
    %v207 = vunpack.c.l.b16 %v113
    %v208 = vunpack.c.h.b16 %v113
    %v209 = vunpack.c.l.b16 %v114
    %v210 = vunpack.c.h.b16 %v114
    %v211 = vpack.c.b16 %v151, %v147
    %v212 = vpack.c.b16 %v152, %v148
    %v213 = vpack.c.b16 %v153, %v149
    %v214 = vpack.c.b16 %v154, %v150
    %v215 = vpack.c.b16 %v159, %v155
    %v216 = vpack.c.b16 %v160, %v156
    %v217 = vpack.c.b16 %v161, %v157
    %v218 = vpack.c.b16 %v162, %v158
    %v219 = vpack.c.b16 %v167, %v163
    %v220 = vpack.c.b16 %v168, %v164
    %v221 = vpack.c.b16 %v169, %v165
    %v222 = vpack.c.b16 %v170, %v166
    %v223 = vpack.c.b16 %v175, %v171
    %v224 = vpack.c.b16 %v176, %v172
    %v225 = vpack.c.b16 %v177, %v173
    %v226 = vpack.c.b16 %v178, %v174
    %v227 = vpack.c.b16 %v183, %v179
    %v228 = vpack.c.b16 %v184, %v180
    %v229 = vpack.c.b16 %v185, %v181
    %v230 = vpack.c.b16 %v186, %v182
    %v231 = vpack.c.b16 %v191, %v187
    %v232 = vpack.c.b16 %v192, %v188
    %v233 = vpack.c.b16 %v193, %v189
    %v234 = vpack.c.b16 %v194, %v190
    %v235 = vpack.c.b16 %v199, %v195
    %v236 = vpack.c.b16 %v200, %v196
    %v237 = vpack.c.b16 %v201, %v197
    %v238 = vpack.c.b16 %v202, %v198
    %v239 = vpack.c.b16 %v207, %v203
    %v240 = vpack.c.b16 %v208, %v204
    %v241 = vpack.c.b16 %v209, %v205
    %v242 = vpack.c.b16 %v210, %v206
    %275 = vmatpush.bf16.msra.mxu0 %v239
    %276 = vmatpush.bf16.msra.mxu0 %v235
    %277 = vmatpush.bf16.msra.mxu0 %v231
    %278 = vmatpush.bf16.msra.mxu0 %v227
    %279 = vmatpush.bf16.msra.mxu0 %v223
    %280 = vmatpush.bf16.msra.mxu0 %v219
    %281 = vmatpush.bf16.msra.mxu0 %v215
    %282 = vmatpush.bf16.msra.mxu0 %v211
    %283 = vmatmul.bf16.gmra.mxu0 %v66
    %v284 = vpop.f32.mrf.mxu0
    %v285 = vadd.f32 0.0, %v284
    %v286 = vpop.f32.mrf.mxu0
    %287 = vdwg.mxu0
    %288 = vmatpush.bf16.msra.mxu0 %v240
    %289 = vmatpush.bf16.msra.mxu0 %v236
    %290 = vmatpush.bf16.msra.mxu0 %v232
    %291 = vmatpush.bf16.msra.mxu0 %v228
    %292 = vmatpush.bf16.msra.mxu0 %v224
    %293 = vmatpush.bf16.msra.mxu0 %v220
    %294 = vmatpush.bf16.msra.mxu0 %v216
    %295 = vmatpush.bf16.msra.mxu0 %v212
    %296 = vmatmul.bf16.gmra.mxu0 %v66
    %v297 = vpop.f32.mrf.mxu0
    %v298 = vadd.f32 0.0, %v297
    %v299 = vpop.f32.mrf.mxu0
    %300 = vdwg.mxu0
    %301 = vmatpush.bf16.msra.mxu0 %v241
    %302 = vmatpush.bf16.msra.mxu0 %v237
    %303 = vmatpush.bf16.msra.mxu0 %v233
    %304 = vmatpush.bf16.msra.mxu0 %v229
    %305 = vmatpush.bf16.msra.mxu0 %v225
    %306 = vmatpush.bf16.msra.mxu0 %v221
    %307 = vmatpush.bf16.msra.mxu0 %v217
    %308 = vmatpush.bf16.msra.mxu0 %v213
    %309 = vmatmul.bf16.gmra.mxu0 %v66
    %v310 = vpop.f32.mrf.mxu0
    %v311 = vadd.f32 0.0, %v310
    %v312 = vpop.f32.mrf.mxu0
    %313 = vdwg.mxu0
    %314 = vmatpush.bf16.msra.mxu0 %v242
    %315 = vmatpush.bf16.msra.mxu0 %v238
    %316 = vmatpush.bf16.msra.mxu0 %v234
    %317 = vmatpush.bf16.msra.mxu0 %v230
    %318 = vmatpush.bf16.msra.mxu0 %v226
    %319 = vmatpush.bf16.msra.mxu0 %v222
    %320 = vmatpush.bf16.msra.mxu0 %v218
    %321 = vmatpush.bf16.msra.mxu0 %v214
    %322 = vmatmul.bf16.gmra.mxu0 %v66
    %v323 = vpop.f32.mrf.mxu0
    %v324 = vadd.f32 0.0, %v323
    %v325 = vpop.f32.mrf.mxu0
    %326 = vdwg.mxu0
    %v343 = vunpack.c.l.b16 %v67
    %v344 = vunpack.c.h.b16 %v67
    %v345 = vunpack.c.l.b16 %v68
    %v346 = vunpack.c.h.b16 %v68
    %v347 = vunpack.c.l.b16 %v69
    %v348 = vunpack.c.h.b16 %v69
    %v349 = vunpack.c.l.b16 %v70
    %v350 = vunpack.c.h.b16 %v70
    %v351 = vunpack.c.l.b16 %v71
    %v352 = vunpack.c.h.b16 %v71
    %v353 = vunpack.c.l.b16 %v72
    %v354 = vunpack.c.h.b16 %v72
    %v355 = vunpack.c.l.b16 %v73
    %v356 = vunpack.c.h.b16 %v73
    %v357 = vunpack.c.l.b16 %v74
    %v358 = vunpack.c.h.b16 %v74
    %v359 = vunpack.c.l.b16 %v75
    %v360 = vunpack.c.h.b16 %v75
    %v361 = vunpack.c.l.b16 %v76
    %v362 = vunpack.c.h.b16 %v76
    %v363 = vunpack.c.l.b16 %v77
    %v364 = vunpack.c.h.b16 %v77
    %v365 = vunpack.c.l.b16 %v78
    %v366 = vunpack.c.h.b16 %v78
    %v367 = vunpack.c.l.b16 %v79
    %v368 = vunpack.c.h.b16 %v79
    %v369 = vunpack.c.l.b16 %v80
    %v370 = vunpack.c.h.b16 %v80
    %v371 = vunpack.c.l.b16 %v81
    %v372 = vunpack.c.h.b16 %v81
    %v373 = vunpack.c.l.b16 %v82
    %v374 = vunpack.c.h.b16 %v82
    %v375 = vpack.c.b16 %v347, %v343
    %v376 = vpack.c.b16 %v348, %v344
    %v377 = vpack.c.b16 %v349, %v345
    %v378 = vpack.c.b16 %v350, %v346
    %v379 = vpack.c.b16 %v355, %v351
    %v380 = vpack.c.b16 %v356, %v352
    %v381 = vpack.c.b16 %v357, %v353
    %v382 = vpack.c.b16 %v358, %v354
    %v383 = vpack.c.b16 %v363, %v359
    %v384 = vpack.c.b16 %v364, %v360
    %v385 = vpack.c.b16 %v365, %v361
    %v386 = vpack.c.b16 %v366, %v362
    %v387 = vpack.c.b16 %v371, %v367
    %v388 = vpack.c.b16 %v372, %v368
    %v389 = vpack.c.b16 %v373, %v369
    %v390 = vpack.c.b16 %v374, %v370
    %vm407 = vcmask 523264
    %v409 = vsel %vm407, %v64, 0
    %411 = vmatpush.bf16.msra.mxu0 0
    %412 = vmatpush.bf16.msra.mxu0 0
    %413 = vmatpush.bf16.msra.mxu0 0
    %414 = vmatpush.bf16.msra.mxu0 0
    %415 = vmatpush.bf16.msra.mxu0 %v387
    %416 = vmatpush.bf16.msra.mxu0 %v383
    %417 = vmatpush.bf16.msra.mxu0 %v379
    %418 = vmatpush.bf16.msra.mxu0 %v375
    %419 = vmatmul.bf16.gmra.mxu0 %v409
    %v420 = vpop.f32.mrf.mxu0
    %v421 = vadd.f32 %v285, %v420
    %v422 = vpop.f32.mrf.mxu0
    %423 = vdwg.mxu0
    %424 = vmatpush.bf16.msra.mxu0 0
    %425 = vmatpush.bf16.msra.mxu0 0
    %426 = vmatpush.bf16.msra.mxu0 0
    %427 = vmatpush.bf16.msra.mxu0 0
    %428 = vmatpush.bf16.msra.mxu0 %v388
    %429 = vmatpush.bf16.msra.mxu0 %v384
    %430 = vmatpush.bf16.msra.mxu0 %v380
    %431 = vmatpush.bf16.msra.mxu0 %v376
    %432 = vmatmul.bf16.gmra.mxu0 %v409
    %v433 = vpop.f32.mrf.mxu0
    %v434 = vadd.f32 %v298, %v433
    %v435 = vpop.f32.mrf.mxu0
    %436 = vdwg.mxu0
    %437 = vmatpush.bf16.msra.mxu0 0
    %438 = vmatpush.bf16.msra.mxu0 0
    %439 = vmatpush.bf16.msra.mxu0 0
    %440 = vmatpush.bf16.msra.mxu0 0
    %441 = vmatpush.bf16.msra.mxu0 %v389
    %442 = vmatpush.bf16.msra.mxu0 %v385
    %443 = vmatpush.bf16.msra.mxu0 %v381
    %444 = vmatpush.bf16.msra.mxu0 %v377
    %445 = vmatmul.bf16.gmra.mxu0 %v409
    %v446 = vpop.f32.mrf.mxu0
    %v447 = vadd.f32 %v311, %v446
    %v448 = vpop.f32.mrf.mxu0
    %449 = vdwg.mxu0
    %450 = vmatpush.bf16.msra.mxu0 0
    %451 = vmatpush.bf16.msra.mxu0 0
    %452 = vmatpush.bf16.msra.mxu0 0
    %453 = vmatpush.bf16.msra.mxu0 0
    %454 = vmatpush.bf16.msra.mxu0 %v390
    %455 = vmatpush.bf16.msra.mxu0 %v386
    %456 = vmatpush.bf16.msra.mxu0 %v382
    %457 = vmatpush.bf16.msra.mxu0 %v378
    %458 = vmatmul.bf16.gmra.mxu0 %v409
    %v459 = vpop.f32.mrf.mxu0
    %v460 = vadd.f32 %v324, %v459
    %v461 = vpop.f32.mrf.mxu0
    %462 = vdwg.mxu0
    %v463 = vxor.u32 %v421, 2147483648
    %v464 = vxor.u32 %v434, 2147483648
    %v465 = vxor.u32 %v447, 2147483648
    %v466 = vmul.f32 %v463, 1.442695
    %v467 = vpow.pop %v466
    %v468 = vmul.f32 %v464, 1.442695
    %v469 = vpow.pop %v468
    %v470 = vmul.f32 %v465, 1.442695
    %v471 = vpow.pop %v470
    %v472 = vadd.f32 %v467, 1.0
    %v473 = vadd.f32 %v469, 1.0
    %v474 = vadd.f32 %v471, 1.0
    %v475 = vrcp.pop %v472
    %v476 = vmul.f32 %v472, %v475
    %v477 = vsub.f32 1.0, %v476
    %v478 = vmul.f32 %v475, %v477
    %v479 = vadd.f32 %v475, %v478
    %vm480 = vweird.f32 %v472
    %vm481 = vweird.f32 %v475
    %vm482 = vmor %vm480, %vm481
    %v483 = vsel %vm482, %v475, %v479
    %v484 = vand.u32 2147483647, %v472
    %vm485 = vcmp.eq.f32.partialorder %v484, 8.507059e+37
    %v486 = vand.u32 %v472, 2147483648
    %v487 = vor.u32 1.1754944e-38, %v486
    %v488 = vsel %vm485, %v487, %v483
    %v489 = vmul.f32 1.0, %v488
    %v490 = vrcp.pop %v473
    %v491 = vmul.f32 %v473, %v490
    %v492 = vsub.f32 1.0, %v491
    %v493 = vmul.f32 %v490, %v492
    %v494 = vadd.f32 %v490, %v493
    %vm495 = vweird.f32 %v473
    %vm496 = vweird.f32 %v490
    %vm497 = vmor %vm495, %vm496
    %v498 = vsel %vm497, %v490, %v494
    %v499 = vand.u32 2147483647, %v473
    %vm500 = vcmp.eq.f32.partialorder %v499, 8.507059e+37
    %v501 = vand.u32 %v473, 2147483648
    %v502 = vor.u32 1.1754944e-38, %v501
    %v503 = vsel %vm500, %v502, %v498
    %v504 = vmul.f32 1.0, %v503
    %v505 = vrcp.pop %v474
    %v506 = vmul.f32 %v474, %v505
    %v507 = vsub.f32 1.0, %v506
    %v508 = vmul.f32 %v505, %v507
    %v509 = vadd.f32 %v505, %v508
    %vm510 = vweird.f32 %v474
    %vm511 = vweird.f32 %v505
    %vm512 = vmor %vm510, %vm511
    %v513 = vsel %vm512, %v505, %v509
    %v514 = vand.u32 2147483647, %v474
    %vm515 = vcmp.eq.f32.partialorder %v514, 8.507059e+37
    %v516 = vand.u32 %v474, 2147483648
    %v517 = vor.u32 1.1754944e-38, %v516
    %v518 = vsel %vm515, %v517, %v513
    %v519 = vmul.f32 1.0, %v518
    %v520 = vtanh.pop %v460
    %v521 = vld [vmem:[#allocation3] sm:$0x3]
    %v522 = vmul.f32 %v521, %v504
    %v523 = vmul.f32 %v489, %v520
    %v524 = vadd.f32 %v522, %v523
    %v525 = vtanh.pop %v524
    %v526 = vmul.f32 %v519, %v525
    %527 = vst [vmem:[#allocation3] sm:$0x3] %v524
    %528 = vst [vmem:[#allocation2] sm:$0x3] %v526
    %529 = vst [vmem:[%s5] sm:$0x3] %v526
    %530 = vst [vmem:[%s6] sm:$0x3] %v524
    // Predicated region
    $region34: #{group_lstm_cell.1} parent=1 // pred_check
      _
    $region35: #{group_lstm_cell.1} parent=1 // pred_check_branch
      %532 = sbr.rel (0) target = $region37
    $region36: #{group_lstm_cell.1} parent=1 // pred_region
      _
    $region37: #{group_lstm_cell.1} parent=1 // pred_fallthru
      _
    // Predicated region
    $region38: #{group_lstm_cell.1} parent=1 // pred_check
      _
    $region39: #{group_lstm_cell.1} parent=1 // pred_check_branch
      %534 = sbr.rel (0) target = $region41
    $region40: #{group_lstm_cell.1} parent=1 // pred_region
      _
    $region41: #{group_lstm_cell.1} parent=1 // pred_fallthru
      _
    // Predicated region
    $region42: #{group_lstm_cell.1} parent=1 // pred_check
      _
    $region43: #{group_lstm_cell.1} parent=1 // pred_check_branch
      %536 = sbr.rel (0) target = $region45
    $region44: #{group_lstm_cell.1} parent=1 // pred_region
      _
    $region45: #{group_lstm_cell.1} parent=1 // pred_fallthru
      _
    // Predicated region
    $region46: #{group_lstm_cell.1} parent=1 // pred_check
      _
    $region47: #{group_lstm_cell.1} parent=1 // pred_check_branch
      %538 = sbr.rel (0) target = $region49
    $region48: #{group_lstm_cell.1} parent=1 // pred_region
      _
    $region49: #{group_lstm_cell.1} parent=1 // pred_fallthru
      _
    %539 = vsyncpa [#allocation5], 1
    %540 = vsyncpa [#allocation7], 1

</llo_original>
